<compile_context>
chip_gen: v7x
topology: tpu7x:2x2x1
jax: 0.10.0
libtpu: 0.0.40
codegen_flags: <defaults>
</compile_context>

<pallas_src>
import functools
import math

import jax
import jax.numpy as jnp
from jax.experimental import pallas as pl
from jax.experimental.pallas import tpu as pltpu


def _rup(v, m):
    return (v + m - 1) // m * m


def _output_layer_kernel(xf_ref, w_ref, p_ref, oh_ref, ohT_ref, o_ref, *,
                         c, T, n, sec_w2, sec_beta, sec_b1, sec_b2, sec_w3,
                         sec_b3):
    f32 = jnp.float32

    xf = xf_ref[...]                                            # (T*c, LBLK) bf16
    # GLU residual x[:, :, T-1, :]: t-major row layout -> contiguous row slice.
    x_in = xf_ref[(T - 1) * c:T * c, :].astype(f32)             # (c, LBLK)

    # ---- tconv1: temporal GLU conv (kernel (T,1)) as one bf16 MXU matmul ----
    w1 = w_ref[0:2 * c, :]                                      # (2c, T*c) bf16
    b1 = p_ref[sec_b1:sec_b1 + 2 * c, 0:1]                      # (2c, 1) f32
    out1 = jnp.dot(w1, xf, preferred_element_type=f32) + b1     # (2c, LBLK) f32
    glu = (out1[:c] + x_in) * jax.nn.sigmoid(out1[c:2 * c])     # (c, LBLK) f32

    # ---- LayerNorm over [n, c] per batch: stats via one-hot MXU matmuls ----
    inv = 1.0 / float(c * n)
    stats = jnp.concatenate(
        [jnp.sum(glu, axis=0, keepdims=True),
         jnp.sum(glu * glu, axis=0, keepdims=True)], axis=0)    # (2, LBLK)
    seg = jnp.dot(stats, oh_ref[...], preferred_element_type=f32)    # (2, TBLK)
    back = jnp.dot(seg, ohT_ref[...], preferred_element_type=f32)    # (2, LBLK)
    mu = back[0:1] * inv
    var = jnp.maximum(back[1:2] * inv - mu * mu, 0.0)
    gamma = p_ref[0:c, :]                                       # (c, LBLK)
    beta = p_ref[sec_beta:sec_beta + c, :]                      # (c, LBLK)
    ln = (glu - mu) * jax.lax.rsqrt(var + 1e-5) * gamma + beta  # (c, LBLK)

    # ---- tconv2: 1x1 conv + identity residual, sigmoid ----
    b2 = p_ref[sec_b2:sec_b2 + c, 0:1]                          # (c, 1)
    if c <= 8:
        # Tiny c: a c x c MXU matmul is pure push/pop latency -> VPU broadcast-MAC.
        z = jnp.broadcast_to(b2, ln.shape)
        for j in range(c):
            w2col = w_ref[sec_w2:sec_w2 + c, j:j + 1].astype(f32)   # (c, 1)
            z = z + w2col * ln[j:j + 1, :]
    else:
        w2 = w_ref[sec_w2:sec_w2 + c, 0:c].astype(f32)          # (c, c)
        z = jnp.dot(w2, ln, preferred_element_type=f32) + b2
    t2 = jax.nn.sigmoid(z + ln)                                 # (c, LBLK)

    # ---- fc: c -> 1 as a VPU multiply + sublane reduce ----
    w3 = p_ref[sec_w3:sec_w3 + c, 0:1]                          # (c, 1)
    b3 = p_ref[sec_b3:sec_b3 + 1, 0:1]                          # (1, 1)
    o_ref[...] = jnp.sum(t2 * w3, axis=0, keepdims=True) + b3   # (1, LBLK)


@functools.partial(jax.jit, static_argnames=("compute_dtype",))
def output_layer_pallas(x, params, compute_dtype=jnp.bfloat16):
    B, c, T, n = x.shape
    f32 = jnp.float32
    itemsize = jnp.dtype(compute_dtype).itemsize

    # ---- lane / block geometry under an explicit VMEM budget ----
    XF_BLOCK_BUDGET = 4 << 20          # bytes per activation tile (one buffer)
    ONEHOT_BUDGET = 2 << 20            # onehot + onehot^T (f32, resident)
    bytes_per_lane = c * T * itemsize
    LB_dense = n * 128 // math.gcd(n, 128)          # lcm(n, 128)
    if LB_dense * bytes_per_lane <= XF_BLOCK_BUDGET:
        np_ = n                        # batches packed densely along lanes
        LB = LB_dense                  # base lane group (whole batches, mult. of 128)
    else:
        np_ = _rup(n, 128)             # pad each batch to a lane multiple of 128
        LB = np_                       # padded lanes masked out of LayerNorm stats
    TB = LB // np_                     # batches per base group

    k = max(1, XF_BLOCK_BUDGET // (LB * bytes_per_lane))             # widen blocks
    k_oh = max(1, int(math.isqrt(max(1, ONEHOT_BUDGET // (8 * LB * TB)))))
    k = min(k, k_oh)                   # keep one-hot matrices small
    groups = -(-B // TB)               # base groups needed to cover all batches
    if groups > 1:                     # keep >= 2 blocks so both v7x TCs get work
        k = min(k, -(-groups // 2))
    k = max(1, min(k, groups))
    num_blocks = -(-groups // k)
    k = -(-groups // num_blocks)       # rebalance: minimal k for this block count
    LBLK, TBLK = k * LB, k * TB
    Ln = num_blocks * LBLK

    # ---- stage activations (bf16): (B, c, T, n) -> (T*c, B*np_) -> pad to Ln ----
    xh = x.astype(compute_dtype)
    if np_ > n:
        xh = jnp.pad(xh, ((0, 0), (0, 0), (0, 0), (0, np_ - n)))
    xf = jnp.transpose(xh, (2, 1, 0, 3)).reshape(T * c, B * np_)
    xf = jnp.pad(xf, ((0, 0), (0, Ln - B * np_)))

    # ---- packed matmul weights (bf16): [w1 | w2], 16-row aligned sections ----
    sec_w2 = _rup(2 * c, 16)
    RW = sec_w2 + _rup(c, 16)
    w1 = params["w1"].reshape(2 * c, c, T).transpose(0, 2, 1).reshape(2 * c, T * c)
    w_all = jnp.zeros((RW, T * c), compute_dtype)
    w_all = w_all.at[0:2 * c, :].set(w1.astype(compute_dtype))
    w_all = w_all.at[sec_w2:sec_w2 + c, 0:c].set(params["w2"].astype(compute_dtype))

    # ---- packed lane params (f32): gamma/beta tiled to block width; vectors at lane 0
    sec_beta = _rup(c, 8)
    sec_b1 = sec_beta + _rup(c, 8)
    sec_b2 = sec_b1 + _rup(2 * c, 8)
    sec_w3 = sec_b2 + _rup(c, 8)
    sec_b3 = sec_w3 + _rup(c, 8)
    RP = sec_b3 + 8
    gT = params["gamma"].astype(f32).T                          # (c, n)
    bT = params["beta"].astype(f32).T
    if np_ > n:
        gT = jnp.pad(gT, ((0, 0), (0, np_ - n)))
        bT = jnp.pad(bT, ((0, 0), (0, np_ - n)))
    p_all = jnp.zeros((RP, LBLK), f32)
    p_all = p_all.at[0:c, :].set(jnp.tile(gT, (1, TBLK)))
    p_all = p_all.at[sec_beta:sec_beta + c, :].set(jnp.tile(bT, (1, TBLK)))
    p_all = p_all.at[sec_b1:sec_b1 + 2 * c, 0].set(params["b1"].astype(f32))
    p_all = p_all.at[sec_b2:sec_b2 + c, 0].set(params["b2"].astype(f32))
    p_all = p_all.at[sec_w3:sec_w3 + c, 0].set(params["w3"].astype(f32).reshape(c))
    p_all = p_all.at[sec_b3, 0].set(params["b3"].astype(f32)[0])

    # ---- one-hot segment matrices (masking padded lanes out of the statistics) ----
    lane = jnp.arange(LBLK)
    valid = (lane % np_) < n
    onehot = ((lane[:, None] // np_ == jnp.arange(TBLK)[None, :])
              & valid[:, None]).astype(f32)                     # (LBLK, TBLK)
    onehotT = onehot.T                                          # (TBLK, LBLK)

    kernel = functools.partial(
        _output_layer_kernel, c=c, T=T, n=n, sec_w2=sec_w2, sec_beta=sec_beta,
        sec_b1=sec_b1, sec_b2=sec_b2, sec_w3=sec_w3, sec_b3=sec_b3)

    # Scoped-VMEM budget: double-buffered activation/output tiles + single-buffered
    # constants + generous allowance for in-kernel f32 intermediates.
    vmem_need = (2 * (T * c * LBLK * itemsize + LBLK * 4)
                 + RW * T * c * itemsize + RP * LBLK * 4 + 2 * LBLK * TBLK * 4
                 + 16 * max(c, 8) * LBLK * 4 + (4 << 20))
    vmem_limit = int(min(max(vmem_need, 32 << 20), 56 << 20))

    const = lambda i: (0, 0)
    out = pl.pallas_call(
        kernel,
        out_shape=jax.ShapeDtypeStruct((1, Ln), f32),
        grid=(num_blocks,),
        in_specs=[
            pl.BlockSpec((T * c, LBLK), lambda i: (0, i)),                    # activations
            pl.BlockSpec((RW, T * c), const, pipeline_mode=pl.Buffered(1)),   # w1 | w2
            pl.BlockSpec((RP, LBLK), const, pipeline_mode=pl.Buffered(1)),    # lane params
            pl.BlockSpec((LBLK, TBLK), const, pipeline_mode=pl.Buffered(1)),  # onehot
            pl.BlockSpec((TBLK, LBLK), const, pipeline_mode=pl.Buffered(1)),  # onehot^T
        ],
        out_specs=pl.BlockSpec((1, LBLK), lambda i: (0, i)),                  # lane-dense
        compiler_params=pltpu.CompilerParams(
            dimension_semantics=("parallel",),
            vmem_limit_bytes=vmem_limit),
    )(xf, w_all, p_all, onehot, onehotT)

    y = out[0, :B * np_].reshape(B, np_)[:, :n]
    return y.reshape(B, 1, 1, n)


def output_layer_ref(x, params):
    """Pure-JAX reference mirroring the PyTorch forward exactly (f32)."""
    B, c, T, n = x.shape
    x = x.astype(jnp.float32)
    w1 = params["w1"].reshape(2 * c, c * T)
    out1 = jnp.einsum("oi,bin->bon", w1, x.reshape(B, c * T, n)) + params["b1"][None, :, None]
    x_in = x[:, :, T - 1, :]
    glu = (out1[:, :c] + x_in) * jax.nn.sigmoid(out1[:, c:])          # (B, c, n)

    perm = jnp.transpose(glu, (0, 2, 1))                               # (B, n, c)
    mu = jnp.mean(perm, axis=(1, 2), keepdims=True)
    var = jnp.mean((perm - mu) ** 2, axis=(1, 2), keepdims=True)
    lnp = (perm - mu) / jnp.sqrt(var + 1e-5) * params["gamma"] + params["beta"]
    ln = jnp.transpose(lnp, (0, 2, 1))                                 # (B, c, n)

    z = jnp.einsum("oi,bin->bon", params["w2"], ln) + params["b2"][None, :, None]
    t2 = jax.nn.sigmoid(z + ln)
    y = jnp.einsum("oi,bin->bon", params["w3"], t2) + params["b3"][None, :, None]
    return y.reshape(B, 1, 1, n)


def make_params(key, c, T, n):
    ks = jax.random.split(key, 8)
    f32 = jnp.float32
    return {
        # tconv1 (GLU): Conv2d(c, 2c, (T,1))
        "w1": 0.1 * jax.random.normal(ks[0], (2 * c, c, T, 1), f32),
        "b1": 0.1 * jax.random.normal(ks[1], (2 * c,), f32),
        # LayerNorm([n, c])
        "gamma": 1.0 + 0.05 * jax.random.normal(ks[2], (n, c), f32),
        "beta": 0.05 * jax.random.normal(ks[3], (n, c), f32),
        # tconv2 (sigmoid): Conv2d(c, c, (1,1))
        "w2": 0.1 * jax.random.normal(ks[4], (c, c), f32),
        "b2": 0.1 * jax.random.normal(ks[5], (c,), f32),
        # fc: Conv2d(c, 1, 1)
        "w3": 0.1 * jax.random.normal(ks[6], (1, c), f32),
        "b3": 0.1 * jax.random.normal(ks[7], (1,), f32),
    }


if __name__ == "__main__":
    B, c, T, n = 2, 4, 8, 16
    key = jax.random.PRNGKey(0)
    kx, kp = jax.random.split(key)
    x = jax.random.normal(kx, (B, c, T, n), jnp.float32)
    params = make_params(kp, c, T, n)

    out = jax.block_until_ready(output_layer_pallas(x, params))
    ref = jax.block_until_ready(output_layer_ref(x, params))

    assert out.shape == (B, 1, 1, n), out.shape
    err = jnp.max(jnp.abs(out - ref))
    # bf16 activation staging (per the perf review) => looser tolerance than the
    # previous all-f32 version; errors observed are O(1e-3).
    assert jnp.allclose(out, ref, atol=3e-2, rtol=3e-2), f"mismatch: max abs err = {err}"
    print("KERNEL_OK")
</pallas_src>

<mosaic_0001>
module attributes {stable_mosaic.version = 11 : i64} {
  func.func @_output_layer_kernel(%arg0: i32, %arg1: memref<32x128xbf16, #tpu.memory_space<vmem>>, %arg2: memref<32x32xbf16, #tpu.memory_space<vmem>>, %arg3: memref<48x128xf32, #tpu.memory_space<vmem>>, %arg4: memref<128x8xf32, #tpu.memory_space<vmem>>, %arg5: memref<8x128xf32, #tpu.memory_space<vmem>>, %arg6: memref<1x128xf32, #tpu.memory_space<vmem>>) attributes {dimension_semantics = [#tpu.dimension_semantics<parallel>], iteration_bounds = array<i64: 1>, scalar_prefetch = 0 : i64, scratch_operands = 0 : i64, tpu.core_type = #tpu.core_type<tc>, window_params = [{transform_indices = @transform_0, window_bounds = array<i64: 32, 128>}, {pipeline_mode = #tpu.pipeline_mode<synchronous>, transform_indices = @transform_1, window_bounds = array<i64: 32, 32>}, {pipeline_mode = #tpu.pipeline_mode<synchronous>, transform_indices = @transform_2, window_bounds = array<i64: 48, 128>}, {pipeline_mode = #tpu.pipeline_mode<synchronous>, transform_indices = @transform_3, window_bounds = array<i64: 128, 8>}, {pipeline_mode = #tpu.pipeline_mode<synchronous>, transform_indices = @transform_4, window_bounds = array<i64: 8, 128>}, {transform_indices = @transform_5, window_bounds = array<i64: 1, 128>}]} {
    %c0 = arith.constant 0 : index
    %c0_0 = arith.constant 0 : index
    %0 = vector.load %arg1[%c0, %c0_0] : memref<32x128xbf16, #tpu.memory_space<vmem>>, vector<32x128xbf16>
    %c28 = arith.constant 28 : index
    %c0_1 = arith.constant 0 : index
    %1 = vector.load %arg1[%c28, %c0_1] : memref<32x128xbf16, #tpu.memory_space<vmem>>, vector<4x128xbf16>
    %2 = arith.extf %1 : vector<4x128xbf16> to vector<4x128xf32>
    %c0_2 = arith.constant 0 : index
    %c0_3 = arith.constant 0 : index
    %3 = vector.load %arg2[%c0_2, %c0_3] : memref<32x32xbf16, #tpu.memory_space<vmem>>, vector<8x32xbf16>
    %c16 = arith.constant 16 : index
    %c0_4 = arith.constant 0 : index
    %4 = vector.load %arg3[%c16, %c0_4] : memref<48x128xf32, #tpu.memory_space<vmem>>, vector<8x1xf32>
    %cst = arith.constant dense<0.000000e+00> : vector<8x128xf32>
    %5 = tpu.matmul %3, %0, %cst {dimension_numbers = #tpu.dot_dimension_numbers<[1], [0], [0], [1], [0, 0, 1, 1], [], []>} : vector<8x32xbf16>, vector<32x128xbf16>, vector<8x128xf32> -> vector<8x128xf32>
    %6 = vector.broadcast %4 : vector<8x1xf32> to vector<8x128xf32>
    %7 = arith.addf %5, %6 : vector<8x128xf32>
    %8 = vector.extract_strided_slice %7 {offsets = [0, 0], sizes = [4, 128], strides = [1, 1]} : vector<8x128xf32> to vector<4x128xf32>
    %9 = arith.addf %8, %2 : vector<4x128xf32>
    %10 = vector.extract_strided_slice %7 {offsets = [4, 0], sizes = [4, 128], strides = [1, 1]} : vector<8x128xf32> to vector<4x128xf32>
    %11 = arith.negf %10 : vector<4x128xf32>
    %12 = math.exp %11 : vector<4x128xf32>
    %cst_5 = arith.constant 1.000000e+00 : f32
    %13 = vector.broadcast %cst_5 : f32 to vector<4x128xf32>
    %14 = arith.addf %13, %12 : vector<4x128xf32>
    %15 = arith.divf %13, %14 : vector<4x128xf32>
    %16 = arith.mulf %9, %15 : vector<4x128xf32>
    %cst_6 = arith.constant dense<0.000000e+00> : vector<128xf32>
    %17 = vector.multi_reduction <add>, %16, %cst_6 [0] : vector<4x128xf32> to vector<128xf32>
    %18 = vector.shape_cast %17 : vector<128xf32> to vector<1x128xf32>
    %19 = arith.mulf %16, %16 : vector<4x128xf32>
    %cst_7 = arith.constant dense<0.000000e+00> : vector<128xf32>
    %20 = vector.multi_reduction <add>, %19, %cst_7 [0] : vector<4x128xf32> to vector<128xf32>
    %21 = vector.shape_cast %20 : vector<128xf32> to vector<1x128xf32>
    %22 = tpu.concatenate %18, %21 in 0 : vector<1x128xf32>, vector<1x128xf32> -> vector<2x128xf32>
    %c0_8 = arith.constant 0 : index
    %c0_9 = arith.constant 0 : index
    %23 = vector.load %arg4[%c0_8, %c0_9] : memref<128x8xf32, #tpu.memory_space<vmem>>, vector<128x8xf32>
    %cst_10 = arith.constant dense<0.000000e+00> : vector<2x8xf32>
    %24 = tpu.matmul %22, %23, %cst_10 {dimension_numbers = #tpu.dot_dimension_numbers<[1], [0], [0], [1], [0, 0, 1, 1], [], []>} : vector<2x128xf32>, vector<128x8xf32>, vector<2x8xf32> -> vector<2x8xf32>
    %c0_11 = arith.constant 0 : index
    %c0_12 = arith.constant 0 : index
    %25 = vector.load %arg5[%c0_11, %c0_12] : memref<8x128xf32, #tpu.memory_space<vmem>>, vector<8x128xf32>
    %cst_13 = arith.constant dense<0.000000e+00> : vector<2x128xf32>
    %26 = tpu.matmul %24, %25, %cst_13 {dimension_numbers = #tpu.dot_dimension_numbers<[1], [0], [0], [1], [0, 0, 1, 1], [], []>} : vector<2x8xf32>, vector<8x128xf32>, vector<2x128xf32> -> vector<2x128xf32>
    %27 = vector.extract_strided_slice %26 {offsets = [0, 0], sizes = [1, 128], strides = [1, 1]} : vector<2x128xf32> to vector<1x128xf32>
    %cst_14 = arith.constant 1.562500e-02 : f32
    %28 = vector.broadcast %cst_14 : f32 to vector<1x128xf32>
    %29 = arith.mulf %27, %28 : vector<1x128xf32>
    %30 = vector.extract_strided_slice %26 {offsets = [1, 0], sizes = [1, 128], strides = [1, 1]} : vector<2x128xf32> to vector<1x128xf32>
    %cst_15 = arith.constant 1.562500e-02 : f32
    %31 = vector.broadcast %cst_15 : f32 to vector<1x128xf32>
    %32 = arith.mulf %30, %31 : vector<1x128xf32>
    %33 = arith.mulf %29, %29 : vector<1x128xf32>
    %34 = arith.subf %32, %33 : vector<1x128xf32>
    %cst_16 = arith.constant 0.000000e+00 : f32
    %35 = vector.broadcast %cst_16 : f32 to vector<1x128xf32>
    %36 = arith.maximumf %34, %35 : vector<1x128xf32>
    %c0_17 = arith.constant 0 : index
    %c0_18 = arith.constant 0 : index
    %37 = vector.load %arg3[%c0_17, %c0_18] : memref<48x128xf32, #tpu.memory_space<vmem>>, vector<4x128xf32>
    %c8 = arith.constant 8 : index
    %c0_19 = arith.constant 0 : index
    %38 = vector.load %arg3[%c8, %c0_19] : memref<48x128xf32, #tpu.memory_space<vmem>>, vector<4x128xf32>
    %39 = vector.broadcast %29 : vector<1x128xf32> to vector<4x128xf32>
    %40 = arith.subf %16, %39 : vector<4x128xf32>
    %cst_20 = arith.constant 9.99999974E-6 : f32
    %41 = vector.broadcast %cst_20 : f32 to vector<1x128xf32>
    %42 = arith.addf %36, %41 : vector<1x128xf32>
    %43 = math.rsqrt %42 : vector<1x128xf32>
    %44 = vector.broadcast %43 : vector<1x128xf32> to vector<4x128xf32>
    %45 = arith.mulf %40, %44 : vector<4x128xf32>
    %46 = arith.mulf %45, %37 : vector<4x128xf32>
    %47 = arith.addf %46, %38 : vector<4x128xf32>
    %c24 = arith.constant 24 : index
    %c0_21 = arith.constant 0 : index
    %48 = vector.load %arg3[%c24, %c0_21] : memref<48x128xf32, #tpu.memory_space<vmem>>, vector<4x1xf32>
    %49 = vector.shape_cast %48 : vector<4x1xf32> to vector<4x1xf32>
    %50 = vector.broadcast %49 : vector<4x1xf32> to vector<4x128xf32>
    %c16_22 = arith.constant 16 : index
    %c0_23 = arith.constant 0 : index
    %51 = vector.load %arg2[%c16_22, %c0_23] : memref<32x32xbf16, #tpu.memory_space<vmem>>, vector<4x1xbf16>
    %52 = arith.extf %51 : vector<4x1xbf16> to vector<4x1xf32>
    %53 = vector.extract_strided_slice %47 {offsets = [0, 0], sizes = [1, 128], strides = [1, 1]} : vector<4x128xf32> to vector<1x128xf32>
    %54 = vector.broadcast %52 : vector<4x1xf32> to vector<4x128xf32>
    %55 = vector.broadcast %53 : vector<1x128xf32> to vector<4x128xf32>
    %56 = arith.mulf %54, %55 : vector<4x128xf32>
    %57 = arith.addf %50, %56 : vector<4x128xf32>
    %c16_24 = arith.constant 16 : index
    %c1 = arith.constant 1 : index
    %58 = vector.load %arg2[%c16_24, %c1] : memref<32x32xbf16, #tpu.memory_space<vmem>>, vector<4x1xbf16>
    %59 = arith.extf %58 : vector<4x1xbf16> to vector<4x1xf32>
    %60 = vector.extract_strided_slice %47 {offsets = [1, 0], sizes = [1, 128], strides = [1, 1]} : vector<4x128xf32> to vector<1x128xf32>
    %61 = vector.broadcast %59 : vector<4x1xf32> to vector<4x128xf32>
    %62 = vector.broadcast %60 : vector<1x128xf32> to vector<4x128xf32>
    %63 = arith.mulf %61, %62 : vector<4x128xf32>
    %64 = arith.addf %57, %63 : vector<4x128xf32>
    %c16_25 = arith.constant 16 : index
    %c2 = arith.constant 2 : index
    %65 = vector.load %arg2[%c16_25, %c2] : memref<32x32xbf16, #tpu.memory_space<vmem>>, vector<4x1xbf16>
    %66 = arith.extf %65 : vector<4x1xbf16> to vector<4x1xf32>
    %67 = vector.extract_strided_slice %47 {offsets = [2, 0], sizes = [1, 128], strides = [1, 1]} : vector<4x128xf32> to vector<1x128xf32>
    %68 = vector.broadcast %66 : vector<4x1xf32> to vector<4x128xf32>
    %69 = vector.broadcast %67 : vector<1x128xf32> to vector<4x128xf32>
    %70 = arith.mulf %68, %69 : vector<4x128xf32>
    %71 = arith.addf %64, %70 : vector<4x128xf32>
    %c16_26 = arith.constant 16 : index
    %c3 = arith.constant 3 : index
    %72 = vector.load %arg2[%c16_26, %c3] : memref<32x32xbf16, #tpu.memory_space<vmem>>, vector<4x1xbf16>
    %73 = arith.extf %72 : vector<4x1xbf16> to vector<4x1xf32>
    %74 = vector.extract_strided_slice %47 {offsets = [3, 0], sizes = [1, 128], strides = [1, 1]} : vector<4x128xf32> to vector<1x128xf32>
    %75 = vector.broadcast %73 : vector<4x1xf32> to vector<4x128xf32>
    %76 = vector.broadcast %74 : vector<1x128xf32> to vector<4x128xf32>
    %77 = arith.mulf %75, %76 : vector<4x128xf32>
    %78 = arith.addf %71, %77 : vector<4x128xf32>
    %79 = arith.addf %78, %47 : vector<4x128xf32>
    %80 = arith.negf %79 : vector<4x128xf32>
    %81 = math.exp %80 : vector<4x128xf32>
    %cst_27 = arith.constant 1.000000e+00 : f32
    %82 = vector.broadcast %cst_27 : f32 to vector<4x128xf32>
    %83 = arith.addf %82, %81 : vector<4x128xf32>
    %84 = arith.divf %82, %83 : vector<4x128xf32>
    %c32 = arith.constant 32 : index
    %c0_28 = arith.constant 0 : index
    %85 = vector.load %arg3[%c32, %c0_28] : memref<48x128xf32, #tpu.memory_space<vmem>>, vector<4x1xf32>
    %c40 = arith.constant 40 : index
    %c0_29 = arith.constant 0 : index
    %86 = vector.load %arg3[%c40, %c0_29] : memref<48x128xf32, #tpu.memory_space<vmem>>, vector<1x1xf32>
    %87 = vector.broadcast %85 : vector<4x1xf32> to vector<4x128xf32>
    %88 = arith.mulf %84, %87 : vector<4x128xf32>
    %cst_30 = arith.constant dense<0.000000e+00> : vector<128xf32>
    %89 = vector.multi_reduction <add>, %88, %cst_30 [0] : vector<4x128xf32> to vector<128xf32>
    %90 = vector.shape_cast %89 : vector<128xf32> to vector<1x128xf32>
    %91 = vector.broadcast %86 : vector<1x1xf32> to vector<1x128xf32>
    %92 = arith.addf %90, %91 : vector<1x128xf32>
    %c0_31 = arith.constant 0 : index
    %c0_32 = arith.constant 0 : index
    %93 = vector.load %arg6[%c0_31, %c0_32] : memref<1x128xf32, #tpu.memory_space<vmem>>, vector<1x128xf32>
    tpu.vector_store %arg6[%c0_31, %c0_32], %92 {strides = array<i32>} : memref<1x128xf32, #tpu.memory_space<vmem>>, vector<1x128xf32>,
    return
  }
  func.func @transform_0(%arg0: i32) -> (i32, i32) {
    %c0_i32 = arith.constant 0 : i32
    %c0_i32_0 = arith.constant 0 : i32
    return %c0_i32, %arg0 : i32, i32
  }
  func.func @transform_1(%arg0: i32) -> (i32, i32) {
    %c0_i32 = arith.constant 0 : i32
    %c0_i32_0 = arith.constant 0 : i32
    %c0_i32_1 = arith.constant 0 : i32
    return %c0_i32, %c0_i32_0 : i32, i32
  }
  func.func @transform_2(%arg0: i32) -> (i32, i32) {
    %c0_i32 = arith.constant 0 : i32
    %c0_i32_0 = arith.constant 0 : i32
    %c0_i32_1 = arith.constant 0 : i32
    return %c0_i32, %c0_i32_0 : i32, i32
  }
  func.func @transform_3(%arg0: i32) -> (i32, i32) {
    %c0_i32 = arith.constant 0 : i32
    %c0_i32_0 = arith.constant 0 : i32
    %c0_i32_1 = arith.constant 0 : i32
    return %c0_i32, %c0_i32_0 : i32, i32
  }
  func.func @transform_4(%arg0: i32) -> (i32, i32) {
    %c0_i32 = arith.constant 0 : i32
    %c0_i32_0 = arith.constant 0 : i32
    %c0_i32_1 = arith.constant 0 : i32
    return %c0_i32, %c0_i32_0 : i32, i32
  }
  func.func @transform_5(%arg0: i32) -> (i32, i32) {
    %c0_i32 = arith.constant 0 : i32
    %c0_i32_0 = arith.constant 0 : i32
    return %c0_i32, %arg0 : i32, i32
  }
}

</mosaic_0001>

<llo_original>
// kernel: squeeze.3
$region0: #{squeeze.3}
  %s0 = inlined_call_operand.vmem [shape: f32[32], index: 0, kind: input, shape index: {}]
  %s1 = inlined_call_operand.hbm [shape: f32[2,1,1,16], index: 1, kind: output, shape index: {}]
  $region1: #{squeeze.3} parent=0
    #allocation0 [shape = 'u8[1024]{0}', space=vmem, size = 0x400, scoped, tag = 'operand span for operand 1']
    #allocation1 [shape = 's32[1]{0}', space=sflag, size = 0x4, scoped, tag = 'scoped memory for squeeze.3']
    #allocation2 [shape = 'u8[4096]{0}', space=vmem, size = 0x1000, scoped, tag = 'scoped mem for output reshape']
    #allocation3 [shape = 'u8[4096]{0}', space=vmem, size = 0x1000, scoped, tag = 'scoped mem for input reshape']
    %2 = vsyncpa [#allocation1], 0
    %s4 = sshllo.u32 0, 1
    %v5 = vld [vmem:[%s0] sm:%s4]
    %6 = vst [vmem:[#allocation3] sm:%s4] %v5
    %v7 = vld [vmem:[#allocation3] sm:$0x1]
    %vm8 = vcmask 130048
    %9 = vst.msk [vmem:[#allocation2] sm:$0x1] %vm8, %v7
    %v10 = vld [vmem:[#allocation3] sm:$0x1]
    %11 = vrot.lane.b32.xlu0 %v10, 112
    %v12 = vpop.permute.xlu0 %11
    %vm13 = vcmask 130048
    %s14 = scalar_lea.vmem [#allocation2], 1
    %15 = vst.msk [vmem:[%s14] sm:$0x1] %vm13, %v12
    %s17 = sshllo.u32 0, 2
    %v19 = vld [vmem:[#allocation2] sm:%s17]
    %s20 = sshllo.u32 0, 2
    %21 = vst [vmem:[#allocation0] sm:%s20] %v19
    %s23 = ssub.s32 32, 32
    %24 = vsyncadd [#allocation1], %s23
    %s26 = sshll.u32 [#allocation0], 4
    %s27 = int_to_ptr.vmem [resolvable:$true] %s26
    %29 = dma.vmem_to_hbm [thread:$0]  %s27, 32, %s1, [#allocation1]
    %30 = dma.done [#allocation1], 32
    %31 = vsyncpa [#allocation1], 1

// kernel: output_layer_pallas.1
$region0: #{output_layer_pallas.1}
  #allocation0 [shape = 'u32[]', space=smem, size = 0x4, offset = 0x4, fixed_abs, tag = 'smem constant byte address 0x4 - core index']
  #allocation1 [shape = 'u32[144,128]{1,0:T(1,128)}', space=vmem, size = 0x12000, scoped, tag = 'internal scratch']
  %s0 = inlined_call_operand.vmem [shape: bf16[32,128], index: 0, kind: input, shape index: {}]
  %s1 = inlined_call_operand.vmem [shape: bf16[32,32], index: 1, kind: input, shape index: {}]
  %s2 = inlined_call_operand.vmem [shape: f32[48,128], index: 2, kind: input, shape index: {}]
  %s3 = inlined_call_operand.vmem [shape: f32[128,8], index: 3, kind: input, shape index: {}]
  %s4 = inlined_call_operand.vmem [shape: f32[8,128], index: 4, kind: input, shape index: {}]
  %s5 = inlined_call_operand.vmem [shape: f32[1,128], index: 5, kind: output, shape index: {}]
  %s6 = sld [smem:[#allocation0]]
  $region30: #{output_layer_pallas.1} parent=0
    _
  %s8 = ssub.s32 1, %s6
  %s9 = scalar_select 0, %s8, %s6
  // Predicated region
  $region2: #{output_layer_pallas.1} parent=0 // pred_check
    _
  $region3: #{output_layer_pallas.1} parent=0 // pred_check_branch
    %11 = sbr.rel (0) target = $region5
  $region4: #{output_layer_pallas.1} parent=0 // pred_region
    _
  $region5: #{output_layer_pallas.1} parent=0 // pred_fallthru
    _
  // Predicated region
  $region6: #{output_layer_pallas.1} parent=0 // pred_check
    _
  $region7: #{output_layer_pallas.1} parent=0 // pred_check_branch
    %13 = sbr.rel (0) target = $region9
  $region8: #{output_layer_pallas.1} parent=0 // pred_region
    _
  $region9: #{output_layer_pallas.1} parent=0 // pred_fallthru
    _
  // Predicated region
  $region10: #{output_layer_pallas.1} parent=0 // pred_check
    _
  $region11: #{output_layer_pallas.1} parent=0 // pred_check_branch
    %15 = sbr.rel (0) target = $region13
  $region12: #{output_layer_pallas.1} parent=0 // pred_region
    _
  $region13: #{output_layer_pallas.1} parent=0 // pred_fallthru
    _
  // Predicated region
  $region14: #{output_layer_pallas.1} parent=0 // pred_check
    _
  $region15: #{output_layer_pallas.1} parent=0 // pred_check_branch
    %17 = sbr.rel (0) target = $region17
  $region16: #{output_layer_pallas.1} parent=0 // pred_region
    _
  $region17: #{output_layer_pallas.1} parent=0 // pred_fallthru
    _
  // Predicated region
  $region18: #{output_layer_pallas.1} parent=0 // pred_check
    _
  $region19: #{output_layer_pallas.1} parent=0 // pred_check_branch
    %19 = sbr.rel (0) target = $region21
  $region20: #{output_layer_pallas.1} parent=0 // pred_region
    _
  $region21: #{output_layer_pallas.1} parent=0 // pred_fallthru
    _
  %v21 = vld [vmem:[%s0] sm:$0xf]
  %v22 = vld [vmem:[%s0 + $0x4] sm:$0xf]
  %v23 = vld [vmem:[%s0 + $0x8] sm:$0xf]
  %v24 = vld [vmem:[%s0 + $0xc] sm:$0xf]
  %v25 = vld [vmem:[%s0 + $0xc] sm:$0xc]
  %v26 = vunpack.c.l.bf16 %v25
  %v27 = vld [vmem:[%s1] sm:$0xf]
  %v28 = vld [vmem:[%s2 + $0x10] sm:$0xff]
  %30 = vset.pattern.permute.xlu0 0
  %31 = vperm.xlu0 %30, %v28
  %v32 = vpop.permute.xlu0 %31
  %v38 = vunpack.c.l.b16 %v21
  %v39 = vunpack.c.l.b16 %v22
  %v40 = vunpack.c.l.b16 %v23
  %v41 = vunpack.c.l.b16 %v24
  %v42 = vpack.c.b16 %v39, %v38
  %v43 = vpack.c.b16 %v41, %v40
  %vm46 = vcmask 261120
  %v48 = vsel %vm46, %v27, 0
  %50 = vmatprep.subr.bf16.mxu0 0
  %51 = vmatpush1.bf16.msra.mxu0 %v42
  %52 = vmatprep.subr.bf16.mxu0 0
  %53 = vmatpush1.bf16.msra.mxu0 %v43
  %54 = vmatprep.subr.bf16.mxu0 0
  %55 = vmatpush1.bf16.msra.mxu0 0
  %56 = vmatprep.subr.bf16.mxu0 0
  %57 = vmatpush1.bf16.msra.mxu0 0
  %58 = vmatprep.subr.bf16.mxu0 0
  %59 = vmatpush1.bf16.msra.mxu0 0
  %60 = vmatprep.subr.bf16.mxu0 0
  %61 = vmatpush1.bf16.msra.mxu0 0
  %62 = vmatprep.subr.bf16.mxu0 0
  %63 = vmatpush1.bf16.msra.mxu0 0
  %64 = vmatprep.subr.bf16.mxu0 0
  %65 = vmatpush1.bf16.msra.mxu0 0
  %66 = vmatprep.subr.bf16.mxu0 0
  %67 = vmatpush1.bf16.msra.mxu0 0
  %68 = vmatprep.subr.bf16.mxu0 0
  %69 = vmatpush1.bf16.msra.mxu0 0
  %70 = vmatprep.subr.bf16.mxu0 0
  %71 = vmatpush1.bf16.msra.mxu0 0
  %72 = vmatprep.subr.bf16.mxu0 0
  %73 = vmatpush1.bf16.msra.mxu0 0
  %74 = vmatprep.subr.bf16.mxu0 0
  %75 = vmatpush1.bf16.msra.mxu0 0
  %76 = vmatprep.subr.bf16.mxu0 0
  %77 = vmatpush1.bf16.msra.mxu0 0
  %78 = vmatprep.subr.bf16.mxu0 0
  %79 = vmatpush1.bf16.msra.mxu0 0
  %80 = vmatprep.subr.bf16.mxu0 0
  %81 = vmatpush1.bf16.msra.mxu0 0
  %82 = vmatprep.mubr.bf16.mxu0 0
  %83 = vmatmul.mubr.bf16.gmra.mrb[0].mxu0 %v48
  %v84 = vpop.f32.mrb[0].mxu0
  %v85 = vadd.f32 %v32, %v84
  %v86 = vpop.f32.mrb[0].mxu0
  %v87 = vpop.f32.mrb[0].mxu0
  %v88 = vpop.f32.mrb[0].mxu0
  %89 = vdwg.mxu0
  %v91 = vrot.slane %v26, 4
  %v93 = vadd.f32 %v85, %v91
  %v94 = vxor.u32 %v85, 2147483648
  %v95 = vmul.f32 %v94, 1.442695
  %v96 = vpow.pop %v95
  %v97 = vadd.f32 %v96, 1.0
  %v98 = vrcp.pop %v97
  %v99 = vmul.f32 1.0, %v98
  %v101 = vrot.slane %v99, 4
  %v103 = vmul.f32 %v93, %v101
  %vm104 = vcmask 1043456
  %v105 = vsel %vm104, %v103, 0.0
  %v106 = vrot.slane %v105, 4
  %v107 = vadd.f32 %v105, %v106
  %v108 = vrot.slane %v107, 2
  %v109 = vadd.f32 %v107, %v108
  %v110 = vrot.slane %v109, 1
  %v111 = vadd.f32 %v109, %v110
  %v112 = vmul.f32 %v103, %v103
  %v113 = vsel %vm104, %v112, 0.0
  %v114 = vrot.slane %v113, 4
  %v115 = vadd.f32 %v113, %v114
  %v116 = vrot.slane %v115, 2
  %v117 = vadd.f32 %v115, %v116
  %v118 = vrot.slane %v117, 1
  %v119 = vadd.f32 %v117, %v118
  %vm120 = vcmask 1040384
  %v121 = vsel %vm120, %v111, %v119
  %v122 = vld [vmem:[%s3] sm:$0xff]
  %v123 = vld [vmem:[%s3 + $0x8] sm:$0xff]
  %v124 = vld [vmem:[%s3 + $0x10] sm:$0xff]
  %v125 = vld [vmem:[%s3 + $0x18] sm:$0xff]
  %v126 = vld [vmem:[%s3 + $0x20] sm:$0xff]
  %v127 = vld [vmem:[%s3 + $0x28] sm:$0xff]
  %v128 = vld [vmem:[%s3 + $0x30] sm:$0xff]
  %v129 = vld [vmem:[%s3 + $0x38] sm:$0xff]
  %v130 = vld [vmem:[%s3 + $0x40] sm:$0xff]
  %v131 = vld [vmem:[%s3 + $0x48] sm:$0xff]
  %v132 = vld [vmem:[%s3 + $0x50] sm:$0xff]
  %v133 = vld [vmem:[%s3 + $0x58] sm:$0xff]
  %v134 = vld [vmem:[%s3 + $0x60] sm:$0xff]
  %v135 = vld [vmem:[%s3 + $0x68] sm:$0xff]
  %v136 = vld [vmem:[%s3 + $0x70] sm:$0xff]
  %v137 = vld [vmem:[%s3 + $0x78] sm:$0xff]
  %138 = vmatprep.subr.mxu0 0.0
  %139 = vmatpush1.msra.mxu0 %v122
  %140 = vmatprep.subr.mxu0 0.0
  %141 = vmatpush1.msra.mxu0 %v123
  %142 = vmatprep.subr.mxu0 0.0
  %143 = vmatpush1.msra.mxu0 %v124
  %144 = vmatprep.subr.mxu0 0.0
  %145 = vmatpush1.msra.mxu0 %v125
  %146 = vmatprep.subr.mxu0 0.0
  %147 = vmatpush1.msra.mxu0 %v126
  %148 = vmatprep.subr.mxu0 0.0
  %149 = vmatpush1.msra.mxu0 %v127
  %150 = vmatprep.subr.mxu0 0.0
  %151 = vmatpush1.msra.mxu0 %v128
  %152 = vmatprep.subr.mxu0 0.0
  %153 = vmatpush1.msra.mxu0 %v129
  %154 = vmatprep.subr.mxu0 0.0
  %155 = vmatpush1.msra.mxu0 %v130
  %156 = vmatprep.subr.mxu0 0.0
  %157 = vmatpush1.msra.mxu0 %v131
  %158 = vmatprep.subr.mxu0 0.0
  %159 = vmatpush1.msra.mxu0 %v132
  %160 = vmatprep.subr.mxu0 0.0
  %161 = vmatpush1.msra.mxu0 %v133
  %162 = vmatprep.subr.mxu0 0.0
  %163 = vmatpush1.msra.mxu0 %v134
  %164 = vmatprep.subr.mxu0 0.0
  %165 = vmatpush1.msra.mxu0 %v135
  %166 = vmatprep.subr.mxu0 0.0
  %167 = vmatpush1.msra.mxu0 %v136
  %168 = vmatprep.subr.mxu0 0.0
  %169 = vmatpush1.msra.mxu0 %v137
  %170 = vmatprep.subr.mxu0 0.0
  %171 = vmatpush1.msra.mxu0 0.0
  %172 = vmatprep.subr.mxu0 0.0
  %173 = vmatpush1.msra.mxu0 0.0
  %174 = vmatprep.subr.mxu0 0.0
  %175 = vmatpush1.msra.mxu0 0.0
  %176 = vmatprep.subr.mxu0 0.0
  %177 = vmatpush1.msra.mxu0 0.0
  %178 = vmatprep.subr.mxu0 0.0
  %179 = vmatpush1.msra.mxu0 0.0
  %180 = vmatprep.subr.mxu0 0.0
  %181 = vmatpush1.msra.mxu0 0.0
  %182 = vmatprep.subr.mxu0 0.0
  %183 = vmatpush1.msra.mxu0 0.0
  %184 = vmatprep.subr.mxu0 0.0
  %185 = vmatpush1.msra.mxu0 0.0
  %186 = vmatprep.subr.mxu0 0.0
  %187 = vmatpush1.msra.mxu0 0.0
  %188 = vmatprep.subr.mxu0 0.0
  %189 = vmatpush1.msra.mxu0 0.0
  %190 = vmatprep.subr.mxu0 0.0
  %191 = vmatpush1.msra.mxu0 0.0
  %192 = vmatprep.subr.mxu0 0.0
  %193 = vmatpush1.msra.mxu0 0.0
  %194 = vmatprep.subr.mxu0 0.0
  %195 = vmatpush1.msra.mxu0 0.0
  %196 = vmatprep.subr.mxu0 0.0
  %197 = vmatpush1.msra.mxu0 0.0
  %198 = vmatprep.subr.mxu0 0.0
  %199 = vmatpush1.msra.mxu0 0.0
  %200 = vmatprep.subr.mxu0 0.0
  %201 = vmatpush1.msra.mxu0 0.0
  %202 = vmatprep.mubr.f32.mxu0 0.0
  %203 = vmatmul.mubr.f32.gmra.mrb[0].mxu0 %v121
  %v204 = vpop.f32.mrb[0].mxu0
  %v205 = vadd.f32 0.0, %v204
  %v206 = vpop.f32.mrb[0].mxu0
  %207 = vdwg.mxu0
  %v208 = vld [vmem:[%s4] sm:$0xff]
  %vm209 = vcmask 64512
  %v211 = vsel %vm209, %v205, 0
  %213 = vmatprep.subr.mxu0 0.0
  %214 = vmatpush1.msra.mxu0 %v208
  %215 = vmatprep.subr.mxu0 0.0
  %216 = vmatpush1.msra.mxu0 0.0
  %217 = vmatprep.subr.mxu0 0.0
  %218 = vmatpush1.msra.mxu0 0.0
  %219 = vmatprep.subr.mxu0 0.0
  %220 = vmatpush1.msra.mxu0 0.0
  %221 = vmatprep.subr.mxu0 0.0
  %222 = vmatpush1.msra.mxu0 0.0
  %223 = vmatprep.subr.mxu0 0.0
  %224 = vmatpush1.msra.mxu0 0.0
  %225 = vmatprep.subr.mxu0 0.0
  %226 = vmatpush1.msra.mxu0 0.0
  %227 = vmatprep.subr.mxu0 0.0
  %228 = vmatpush1.msra.mxu0 0.0
  %229 = vmatprep.subr.mxu0 0.0
  %230 = vmatpush1.msra.mxu0 0.0
  %231 = vmatprep.subr.mxu0 0.0
  %232 = vmatpush1.msra.mxu0 0.0
  %233 = vmatprep.subr.mxu0 0.0
  %234 = vmatpush1.msra.mxu0 0.0
  %235 = vmatprep.subr.mxu0 0.0
  %236 = vmatpush1.msra.mxu0 0.0
  %237 = vmatprep.subr.mxu0 0.0
  %238 = vmatpush1.msra.mxu0 0.0
  %239 = vmatprep.subr.mxu0 0.0
  %240 = vmatpush1.msra.mxu0 0.0
  %241 = vmatprep.subr.mxu0 0.0
  %242 = vmatpush1.msra.mxu0 0.0
  %243 = vmatprep.subr.mxu0 0.0
  %244 = vmatpush1.msra.mxu0 0.0
  %245 = vmatprep.subr.mxu0 0.0
  %246 = vmatpush1.msra.mxu0 0.0
  %247 = vmatprep.subr.mxu0 0.0
  %248 = vmatpush1.msra.mxu0 0.0
  %249 = vmatprep.subr.mxu0 0.0
  %250 = vmatpush1.msra.mxu0 0.0
  %251 = vmatprep.subr.mxu0 0.0
  %252 = vmatpush1.msra.mxu0 0.0
  %253 = vmatprep.subr.mxu0 0.0
  %254 = vmatpush1.msra.mxu0 0.0
  %255 = vmatprep.subr.mxu0 0.0
  %256 = vmatpush1.msra.mxu0 0.0
  %257 = vmatprep.subr.mxu0 0.0
  %258 = vmatpush1.msra.mxu0 0.0
  %259 = vmatprep.subr.mxu0 0.0
  %260 = vmatpush1.msra.mxu0 0.0
  %261 = vmatprep.subr.mxu0 0.0
  %262 = vmatpush1.msra.mxu0 0.0
  %263 = vmatprep.subr.mxu0 0.0
  %264 = vmatpush1.msra.mxu0 0.0
  %265 = vmatprep.subr.mxu0 0.0
  %266 = vmatpush1.msra.mxu0 0.0
  %267 = vmatprep.subr.mxu0 0.0
  %268 = vmatpush1.msra.mxu0 0.0
  %269 = vmatprep.subr.mxu0 0.0
  %270 = vmatpush1.msra.mxu0 0.0
  %271 = vmatprep.subr.mxu0 0.0
  %272 = vmatpush1.msra.mxu0 0.0
  %273 = vmatprep.subr.mxu0 0.0
  %274 = vmatpush1.msra.mxu0 0.0
  %275 = vmatprep.subr.mxu0 0.0
  %276 = vmatpush1.msra.mxu0 0.0
  %277 = vmatprep.mubr.f32.mxu0 0.0
  %278 = vmatmul.mubr.f32.gmra.mrb[0].mxu0 %v211
  %v279 = vpop.f32.mrb[0].mxu0
  %v280 = vadd.f32 0.0, %v279
  %v281 = vpop.f32.mrb[0].mxu0
  %282 = vdwg.mxu0
  %v283 = vmul.f32 %v280, 0.015625
  %v284 = vmul.f32 %v283, %v283
  %v286 = vrot.slane %v284, 7
  %v288 = vsub.f32 %v283, %v286
  %v289 = vmax.f32 %v288, 0.0
  %v290 = vld [vmem:[%s2] sm:$0xf]
  %v291 = vld [vmem:[%s2 + $0x8] sm:$0xf]
  %v292 = vlaneseq
  %v293 = vshrl.u32 %v292, 7
  %v294 = vsub.s32 0, %v293
  %v295 = vrot.slane %v283, %v294
  %v296 = vsub.f32 %v103, %v295
  %v297 = vadd.f32 %v289, 1e-05
  %v298 = vrsqrt.pop %v297
  %v299 = vlaneseq
  %v300 = vshrl.u32 %v299, 7
  %v301 = vsub.s32 1, %v300
  %v302 = vrot.slane %v298, %v301
  %v303 = vmul.f32 %v296, %v302
  %v304 = vmul.f32 %v303, %v290
  %v305 = vadd.f32 %v304, %v291
  %v306 = vld [vmem:[%s2 + $0x18] sm:$0xf]
  %308 = vset.pattern.permute.xlu0 0
  %309 = vperm.xlu0 %308, %v306
  %v310 = vpop.permute.xlu0 %309
  %v312 = vld [vmem:[%s1 + $0x8] sm:$0x3]
  %v313 = vunpack.c.l.bf16 %v312
  %315 = vset.pattern.permute.xlu0 0
  %316 = vperm.xlu0 %315, %v313
  %v317 = vpop.permute.xlu0 %316
  %v319 = vlaneseq
  %v320 = vshrl.u32 %v319, 7
  %v321 = vsub.s32 0, %v320
  %v322 = vrot.slane %v305, %v321
  %v323 = vmul.f32 %v317, %v322
  %v324 = vadd.f32 %v310, %v323
  %325 = vset.pattern.permute.xlu0 1
  %326 = vperm.xlu0 %325, %v313
  %v327 = vpop.permute.xlu0 %326
  %v329 = vlaneseq
  %v330 = vshrl.u32 %v329, 7
  %v331 = vsub.s32 1, %v330
  %v332 = vrot.slane %v305, %v331
  %v333 = vmul.f32 %v327, %v332
  %v334 = vadd.f32 %v324, %v333
  %335 = vset.pattern.permute.xlu0 2
  %336 = vperm.xlu0 %335, %v313
  %v337 = vpop.permute.xlu0 %336
  %v339 = vlaneseq
  %v340 = vshrl.u32 %v339, 7
  %v341 = vsub.s32 2, %v340
  %v342 = vrot.slane %v305, %v341
  %v343 = vmul.f32 %v337, %v342
  %v344 = vadd.f32 %v334, %v343
  %345 = vset.pattern.permute.xlu0 3
  %346 = vperm.xlu0 %345, %v313
  %v347 = vpop.permute.xlu0 %346
  %v349 = vlaneseq
  %v350 = vshrl.u32 %v349, 7
  %v351 = vsub.s32 3, %v350
  %v352 = vrot.slane %v305, %v351
  %v353 = vmul.f32 %v347, %v352
  %v354 = vadd.f32 %v344, %v353
  %v355 = vadd.f32 %v354, %v305
  %v356 = vxor.u32 %v355, 2147483648
  %v357 = vmul.f32 %v356, 1.442695
  %v358 = vpow.pop %v357
  %v359 = vadd.f32 %v358, 1.0
  %v360 = vrcp.pop %v359
  %v361 = vmul.f32 1.0, %v360
  %v362 = vld [vmem:[%s2 + $0x20] sm:$0xf]
  %v363 = vld [vmem:[%s2 + $0x28] sm:$0x1]
  %365 = vset.pattern.permute.xlu0 0
  %366 = vperm.xlu0 %365, %v362
  %v367 = vpop.permute.xlu0 %366
  %v369 = vmul.f32 %v361, %v367
  %v370 = vsel %vm104, %v369, 0.0
  %v371 = vrot.slane %v370, 4
  %v372 = vadd.f32 %v370, %v371
  %v373 = vrot.slane %v372, 2
  %v374 = vadd.f32 %v372, %v373
  %v375 = vrot.slane %v374, 1
  %v376 = vadd.f32 %v374, %v375
  %378 = vset.pattern.permute.xlu0 0
  %379 = vperm.xlu0 %378, %v363
  %v380 = vpop.permute.xlu0 %379
  %v382 = vadd.f32 %v376, %v380
  %383 = vst [vmem:[%s5] sm:$0x1] %v382
  // Predicated region
  $region22: #{output_layer_pallas.1} parent=0 // pred_check
    _
  $region23: #{output_layer_pallas.1} parent=0 // pred_check_branch
    %385 = sbr.rel (0) target = $region25
  $region24: #{output_layer_pallas.1} parent=0 // pred_region
    _
  $region25: #{output_layer_pallas.1} parent=0 // pred_fallthru
    _
  // Predicated region
  $region26: #{output_layer_pallas.1} parent=0 // pred_check
    _
  $region27: #{output_layer_pallas.1} parent=0 // pred_check_branch
    %387 = sbr.rel (0) target = $region29
  $region28: #{output_layer_pallas.1} parent=0 // pred_region
    _
  $region29: #{output_layer_pallas.1} parent=0 // pred_fallthru
    _

</llo_original>
